<compile_context>
chip_gen: v7x
topology: tpu7x:2x2x1
jax: 0.10.0
libtpu: 0.0.40
codegen_flags: <defaults>
</compile_context>

<pallas_src>
import jax
import jax.numpy as jnp
from jax.experimental import pallas as pl
from jax.experimental.pallas import tpu as pltpu

HIDDEN = 768        # fixed by nn.Linear(768, 4)
NUM_CLASSES = 4
C_PAD = 128         # pad class dim to one full lane register for the matmul


def _round_up(x, m):
    return ((x + m - 1) // m) * m


def cls_head_kernel(x_ref, w_ref, b_ref, o_ref):
    """x: (TB, H) bf16/f32, w: (H, C_PAD) bf16, b: (1, C_PAD) f32
       -> o: (TB, NUM_CLASSES) f32 = softmax(x @ w + b, axis=1)[:, :4].

    Padded classes carry bias = -1e30, so exp() underflows to 0 and the
    softmax over 128 lanes equals the 4-class softmax exactly.
    """
    # Cast on the VPU right before the dot: no standalone XLA cast pass, and
    # an f32 producer only costs its (unavoidable) f32 HBM read.
    x = x_ref[...].astype(jnp.bfloat16)
    logits = jnp.dot(x, w_ref[...],
                     preferred_element_type=jnp.float32) + b_ref[...]
    m = jnp.max(logits, axis=1, keepdims=True)
    e = jnp.exp(logits - m)
    s = jnp.sum(e, axis=1, keepdims=True)
    probs = e * pl.reciprocal(s, approx=True)
    # Store only the real class columns (masked vst; input DMA dominates the
    # store slot here, so narrow output just cuts HBM write traffic ~32x).
    o_ref[...] = probs[:, :NUM_CLASSES]


def prepare_head_params(w, b, compute_dtype=jnp.bfloat16):
    """Pad fc1 weights once (module-init time), not per forward call.

    w: (768, 4), b: (4,)  ->  w_pad: (768, 128) compute_dtype, b_pad: (1, 128) f32
    Keep b_pad in f32: casting the -1e30 pad to bf16 would saturate.
    """
    w_pad = jnp.pad(w.astype(jnp.float32),
                    ((0, 0), (0, C_PAD - NUM_CLASSES))).astype(compute_dtype)
    b_pad = jnp.pad(b.astype(jnp.float32)[None, :],
                    ((0, 0), (0, C_PAD - NUM_CLASSES)),
                    constant_values=-1e30)
    return w_pad, b_pad


def sentence_classifier_head(cls_hidden, w_pad, b_pad, *, max_rows_per_tile=2048):
    """cls_hidden: (B, 768) bf16 or f32, w_pad: (768, 128), b_pad: (1, 128)
       -> (B, 4) f32 softmax probabilities."""
    B, H = cls_hidden.shape
    assert H == HIDDEN

    # Batch tile: multiple of 8 sublanes.  Default 2048 keeps the
    # double-buffered tile well inside VMEM even for f32 input (2 x 6 MiB) and
    # halves grid-step overhead vs. 1024 on v6e/v7x.
    tb = min(max_rows_per_tile, _round_up(B, 8))
    if B > 8:
        # Guarantee >= 2 grid steps so the "parallel" batch axis actually
        # shards across v7x's two TensorCores (harmless on v5e/v6e).
        tb = min(tb, _round_up(pl.cdiv(B, 2), 8))
    nb = pl.cdiv(B, tb)

    # No jnp.pad of the activations: the final grid step is a partial tile.
    # Rows >= B inside that tile produce garbage softmax values but are never
    # written to the (B, 4) output (row-independent compute, masked writeback).
    return pl.pallas_call(
        cls_head_kernel,
        out_shape=jax.ShapeDtypeStruct((B, NUM_CLASSES), jnp.float32),
        grid=(nb,),
        in_specs=[
            pl.BlockSpec((tb, HIDDEN), lambda i: (i, 0)),     # streamed per tile
            pl.BlockSpec((HIDDEN, C_PAD), lambda i: (0, 0)),  # constant block: VMEM-resident
            pl.BlockSpec((1, C_PAD), lambda i: (0, 0)),       # constant block: VMEM-resident
        ],
        out_specs=pl.BlockSpec((tb, NUM_CLASSES), lambda i: (i, 0)),
        compiler_params=pltpu.CompilerParams(
            dimension_semantics=("parallel",),   # shard grid steps across TCs
            vmem_limit_bytes=32 << 20,           # safe on v5e/v6e/v7x, fits TB=2048 f32
        ),
    )(cls_hidden, w_pad, b_pad)


def fake_klue_cls(input_ids, attention_mask, emb_table):
    """Deterministic stand-in for base_model(...)[0][:, 0] (plain-JAX glue).

    Only the CLS (position 0) row is computed — no (B, S, 768) hidden slab —
    and it is emitted directly in bf16 (the cast fuses into the gather fusion,
    halving the HBM stream the head kernel has to read).
    """
    cls = emb_table[input_ids[:, 0]]                               # (B, H) f32
    cls = cls * attention_mask[:, 0][:, None].astype(cls.dtype)
    return cls.astype(jnp.bfloat16)


def sentence_classifier_forward(input_ids, attention_mask, emb_table, w_pad, b_pad):
    cls = fake_klue_cls(input_ids, attention_mask, emb_table)      # (B, 768) bf16
    return sentence_classifier_head(cls, w_pad, b_pad)             # (B, 4) f32


if __name__ == "__main__":
    B, S, VOCAB = 2, 8, 100

    key = jax.random.PRNGKey(0)
    k_emb, k_w, k_b, k_ids = jax.random.split(key, 4)

    # Deterministic parameter init (synthetic; shapes from the module __init__).
    emb_table = jax.random.normal(k_emb, (VOCAB, HIDDEN), jnp.float32) * 0.02
    fc1_w = jax.random.normal(k_w, (HIDDEN, NUM_CLASSES), jnp.float32) * 0.02
    fc1_b = jax.random.normal(k_b, (NUM_CLASSES,), jnp.float32) * 0.02

    input_ids = jax.random.randint(k_ids, (B, S), 0, VOCAB, dtype=jnp.int32)
    attention_mask = jnp.ones((B, S), jnp.int32)

    # Pad/cast the constant head parameters once, outside the hot path.
    w_pad, b_pad = prepare_head_params(fc1_w, fc1_b)

    fwd = jax.jit(lambda ids, mask: sentence_classifier_forward(
        ids, mask, emb_table, w_pad, b_pad))
    out = jax.block_until_ready(fwd(input_ids, attention_mask))

    # Reference check in plain f32 JAX (bf16 matmul + approx reciprocal in the
    # kernel -> relaxed tolerance).
    cls_ref = emb_table[input_ids[:, 0]] * attention_mask[:, 0][:, None].astype(jnp.float32)
    ref = jax.nn.softmax(cls_ref @ fc1_w + fc1_b, axis=1)
    assert out.shape == (B, NUM_CLASSES)
    assert jnp.allclose(out, ref, atol=5e-3), "mismatch vs reference"
    assert jnp.allclose(jnp.sum(out, axis=1), 1.0, atol=5e-3), "softmax not normalized"

    print("KERNEL_OK")
</pallas_src>

<mosaic_0001>
module attributes {stable_mosaic.version = 11 : i64} {
  func.func @cls_head_kernel(%arg0: i32, %arg1: memref<8x768xbf16, #tpu.memory_space<vmem>>, %arg2: memref<768x128xbf16, #tpu.memory_space<vmem>>, %arg3: memref<1x128xf32, #tpu.memory_space<vmem>>, %arg4: memref<8x4xf32, #tpu.memory_space<vmem>>) attributes {dimension_semantics = [#tpu.dimension_semantics<parallel>], iteration_bounds = array<i64: 1>, scalar_prefetch = 0 : i64, scratch_operands = 0 : i64, tpu.core_type = #tpu.core_type<tc>, window_params = [{transform_indices = @transform_0, window_bounds = array<i64: 8, 768>}, {pipeline_mode = #tpu.pipeline_mode<synchronous>, transform_indices = @transform_1, window_bounds = array<i64: 768, 128>}, {pipeline_mode = #tpu.pipeline_mode<synchronous>, transform_indices = @transform_2, window_bounds = array<i64: 1, 128>}, {transform_indices = @transform_3, window_bounds = array<i64: 8, 4>}]} {
    %c0 = arith.constant 0 : index
    %c0_0 = arith.constant 0 : index
    %0 = vector.load %arg1[%c0, %c0_0] : memref<8x768xbf16, #tpu.memory_space<vmem>>, vector<8x768xbf16>
    %c0_1 = arith.constant 0 : index
    %c0_2 = arith.constant 0 : index
    %1 = vector.load %arg2[%c0_1, %c0_2] : memref<768x128xbf16, #tpu.memory_space<vmem>>, vector<768x128xbf16>
    %cst = arith.constant dense<0.000000e+00> : vector<8x128xf32>
    %2 = tpu.matmul %0, %1, %cst {dimension_numbers = #tpu.dot_dimension_numbers<[1], [0], [0], [1], [0, 0, 1, 1], [], []>} : vector<8x768xbf16>, vector<768x128xbf16>, vector<8x128xf32> -> vector<8x128xf32>
    %c0_3 = arith.constant 0 : index
    %c0_4 = arith.constant 0 : index
    %3 = vector.load %arg3[%c0_3, %c0_4] : memref<1x128xf32, #tpu.memory_space<vmem>>, vector<1x128xf32>
    %4 = vector.broadcast %3 : vector<1x128xf32> to vector<8x128xf32>
    %5 = arith.addf %2, %4 : vector<8x128xf32>
    %cst_5 = arith.constant dense<0xFF800000> : vector<8xf32>
    %6 = vector.multi_reduction <maximumf>, %5, %cst_5 [1] : vector<8x128xf32> to vector<8xf32>
    %7 = vector.shape_cast %6 : vector<8xf32> to vector<8x1xf32>
    %8 = vector.broadcast %7 : vector<8x1xf32> to vector<8x128xf32>
    %9 = arith.subf %5, %8 : vector<8x128xf32>
    %10 = math.exp %9 : vector<8x128xf32>
    %cst_6 = arith.constant dense<0.000000e+00> : vector<8xf32>
    %11 = vector.multi_reduction <add>, %10, %cst_6 [1] : vector<8x128xf32> to vector<8xf32>
    %12 = vector.shape_cast %11 : vector<8xf32> to vector<8x1xf32>
    %13 = tpu.reciprocal %12 {approx = true} : vector<8x1xf32> -> vector<8x1xf32>
    %14 = vector.broadcast %13 : vector<8x1xf32> to vector<8x128xf32>
    %15 = arith.mulf %10, %14 : vector<8x128xf32>
    %16 = vector.extract_strided_slice %15 {offsets = [0, 0], sizes = [8, 4], strides = [1, 1]} : vector<8x128xf32> to vector<8x4xf32>
    %c0_7 = arith.constant 0 : index
    %c0_8 = arith.constant 0 : index
    %17 = vector.load %arg4[%c0_7, %c0_8] : memref<8x4xf32, #tpu.memory_space<vmem>>, vector<8x4xf32>
    tpu.vector_store %arg4[%c0_7, %c0_8], %16 {strides = array<i32>} : memref<8x4xf32, #tpu.memory_space<vmem>>, vector<8x4xf32>,
    return
  }
  func.func @transform_0(%arg0: i32) -> (i32, i32) {
    %c0_i32 = arith.constant 0 : i32
    %c0_i32_0 = arith.constant 0 : i32
    return %arg0, %c0_i32 : i32, i32
  }
  func.func @transform_1(%arg0: i32) -> (i32, i32) {
    %c0_i32 = arith.constant 0 : i32
    %c0_i32_0 = arith.constant 0 : i32
    %c0_i32_1 = arith.constant 0 : i32
    return %c0_i32, %c0_i32_0 : i32, i32
  }
  func.func @transform_2(%arg0: i32) -> (i32, i32) {
    %c0_i32 = arith.constant 0 : i32
    %c0_i32_0 = arith.constant 0 : i32
    %c0_i32_1 = arith.constant 0 : i32
    return %c0_i32, %c0_i32_0 : i32, i32
  }
  func.func @transform_3(%arg0: i32) -> (i32, i32) {
    %c0_i32 = arith.constant 0 : i32
    %c0_i32_0 = arith.constant 0 : i32
    return %arg0, %c0_i32 : i32, i32
  }
}

</mosaic_0001>

<llo_original>
// kernel: _lambda_.1
$region0: #{_lambda_.1}
  #allocation0 [shape = 'u32[]', space=smem, size = 0x4, offset = 0x4, fixed_abs, tag = 'smem constant byte address 0x4 - core index']
  #allocation1 [shape = 'u32[144,128]{1,0:T(1,128)}', space=vmem, size = 0x12000, scoped, tag = 'internal scratch']
  %s0 = inlined_call_operand.vmem [shape: bf16[2,768], index: 0, kind: input, shape index: {}]
  %s1 = inlined_call_operand.hbm [shape: bf16[768,128], index: 1, kind: input, shape index: {}]
  %s2 = inlined_call_operand.vmem [shape: f32[1,128], index: 2, kind: input, shape index: {}]
  %s3 = inlined_call_operand.hbm [shape: f32[2,4], index: 3, kind: output, shape index: {}]
  %s4 = sld [smem:[#allocation0]]
  $region26: #{_lambda_.1} parent=0
    _
  %s6 = ssub.s32 1, %s4
  %s7 = scalar_select 0, %s6, %s4
  $region1: #{_lambda_.1} parent=0
    #allocation2 [shape = 'u8[196608]{0}', space=vmem, size = 0x30000, scoped, tag = 'input window, operand 1, single buffered']
    #allocation3 [shape = 's32[1]{0}', space=sflag, size = 0x4, scoped, tag = 'scoped memory for _lambda_.1']
    #allocation4 [shape = 's32[1]{0}', space=sflag, size = 0x4, scoped, tag = 'scoped memory for _lambda_.1']
    #allocation5 [shape = 'u8[4096]{0}', space=vmem, size = 0x1000, scoped, tag = 'output window, operand 0, single buffered']
    %8 = vsyncpa [#allocation3], 0
    %9 = vsyncpa [#allocation4], 0
    // Predicated region
    $region2: #{_lambda_.1} parent=1 // pred_check
      _
    $region3: #{_lambda_.1} parent=1 // pred_check_branch
      %11 = sbr.rel (0) target = $region5
    $region4: #{_lambda_.1} parent=1 // pred_region
      _
    $region5: #{_lambda_.1} parent=1 // pred_fallthru
      _
    // Predicated region
    $region6: #{_lambda_.1} parent=1 // pred_check
      _
    $region7: #{_lambda_.1} parent=1 // pred_check_branch
      %13 = sbr.rel (0) target = $region9
    $region8: #{_lambda_.1} parent=1 // pred_region
      %s15 = ssub.s32 6144, 6144
      %16 = vsyncadd [#allocation3], %s15
      %s17 = sshll.u32 [#allocation2], 4
      %s18 = int_to_ptr.vmem [resolvable:$true] %s17
      %23 = dma.hbm_to_vmem [thread:$0]  %s1, 6144, %s18, [#allocation3], 64, 64, 4
    $region9: #{_lambda_.1} parent=1 // pred_fallthru
      _
    // Predicated region
    $region10: #{_lambda_.1} parent=1 // pred_check
      _
    $region11: #{_lambda_.1} parent=1 // pred_check_branch
      %25 = sbr.rel (0) target = $region13
    $region12: #{_lambda_.1} parent=1 // pred_region
      _
    $region13: #{_lambda_.1} parent=1 // pred_fallthru
      _
    // Predicated region
    $region14: #{_lambda_.1} parent=1 // pred_check
      _
    $region15: #{_lambda_.1} parent=1 // pred_check_branch
      %27 = sbr.rel (0) target = $region17
    $region16: #{_lambda_.1} parent=1 // pred_region
      %28 = dma.done [#allocation3], 6144
    $region17: #{_lambda_.1} parent=1 // pred_fallthru
      _
    %v30 = vld [vmem:[%s0] sm:$0x3f]
    %v31 = vld [vmem:[%s0 + $0x6] sm:$0x3f]
    %v32 = vld [vmem:[%s0 + $0xc] sm:$0x3f]
    %v33 = vld [vmem:[%s0 + $0x12] sm:$0x3f]
    %v34 = vld [vmem:[#allocation2] sm:$0xf]
    %v35 = vld [vmem:[#allocation2 + $0x4] sm:$0xf]
    %v36 = vld [vmem:[#allocation2 + $0x8] sm:$0xf]
    %v37 = vld [vmem:[#allocation2 + $0xc] sm:$0xf]
    %v38 = vld [vmem:[#allocation2 + $0x10] sm:$0xf]
    %v39 = vld [vmem:[#allocation2 + $0x14] sm:$0xf]
    %v40 = vld [vmem:[#allocation2 + $0x18] sm:$0xf]
    %v41 = vld [vmem:[#allocation2 + $0x1c] sm:$0xf]
    %v42 = vld [vmem:[#allocation2 + $0x20] sm:$0xf]
    %v43 = vld [vmem:[#allocation2 + $0x24] sm:$0xf]
    %v44 = vld [vmem:[#allocation2 + $0x28] sm:$0xf]
    %v45 = vld [vmem:[#allocation2 + $0x2c] sm:$0xf]
    %v46 = vld [vmem:[#allocation2 + $0x30] sm:$0xf]
    %v47 = vld [vmem:[#allocation2 + $0x34] sm:$0xf]
    %v48 = vld [vmem:[#allocation2 + $0x38] sm:$0xf]
    %v49 = vld [vmem:[#allocation2 + $0x3c] sm:$0xf]
    %v50 = vld [vmem:[#allocation2 + $0x40] sm:$0xf]
    %v51 = vld [vmem:[#allocation2 + $0x44] sm:$0xf]
    %v52 = vld [vmem:[#allocation2 + $0x48] sm:$0xf]
    %v53 = vld [vmem:[#allocation2 + $0x4c] sm:$0xf]
    %v54 = vld [vmem:[#allocation2 + $0x50] sm:$0xf]
    %v55 = vld [vmem:[#allocation2 + $0x54] sm:$0xf]
    %v56 = vld [vmem:[#allocation2 + $0x58] sm:$0xf]
    %v57 = vld [vmem:[#allocation2 + $0x5c] sm:$0xf]
    %v58 = vld [vmem:[#allocation2 + $0x60] sm:$0xf]
    %v59 = vld [vmem:[#allocation2 + $0x64] sm:$0xf]
    %v60 = vld [vmem:[#allocation2 + $0x68] sm:$0xf]
    %v61 = vld [vmem:[#allocation2 + $0x6c] sm:$0xf]
    %v62 = vld [vmem:[#allocation2 + $0x70] sm:$0xf]
    %v63 = vld [vmem:[#allocation2 + $0x74] sm:$0xf]
    %v64 = vld [vmem:[#allocation2 + $0x78] sm:$0xf]
    %v65 = vld [vmem:[#allocation2 + $0x7c] sm:$0xf]
    %v66 = vld [vmem:[#allocation2 + $0x80] sm:$0xf]
    %v67 = vld [vmem:[#allocation2 + $0x84] sm:$0xf]
    %v68 = vld [vmem:[#allocation2 + $0x88] sm:$0xf]
    %v69 = vld [vmem:[#allocation2 + $0x8c] sm:$0xf]
    %v70 = vld [vmem:[#allocation2 + $0x90] sm:$0xf]
    %v71 = vld [vmem:[#allocation2 + $0x94] sm:$0xf]
    %v72 = vld [vmem:[#allocation2 + $0x98] sm:$0xf]
    %v73 = vld [vmem:[#allocation2 + $0x9c] sm:$0xf]
    %v74 = vld [vmem:[#allocation2 + $0xa0] sm:$0xf]
    %v75 = vld [vmem:[#allocation2 + $0xa4] sm:$0xf]
    %v76 = vld [vmem:[#allocation2 + $0xa8] sm:$0xf]
    %v77 = vld [vmem:[#allocation2 + $0xac] sm:$0xf]
    %v78 = vld [vmem:[#allocation2 + $0xb0] sm:$0xf]
    %v79 = vld [vmem:[#allocation2 + $0xb4] sm:$0xf]
    %v80 = vld [vmem:[#allocation2 + $0xb8] sm:$0xf]
    %v81 = vld [vmem:[#allocation2 + $0xbc] sm:$0xf]
    %v82 = vld [vmem:[#allocation2 + $0xc0] sm:$0xf]
    %v83 = vld [vmem:[#allocation2 + $0xc4] sm:$0xf]
    %v84 = vld [vmem:[#allocation2 + $0xc8] sm:$0xf]
    %v85 = vld [vmem:[#allocation2 + $0xcc] sm:$0xf]
    %v86 = vld [vmem:[#allocation2 + $0xd0] sm:$0xf]
    %v87 = vld [vmem:[#allocation2 + $0xd4] sm:$0xf]
    %v88 = vld [vmem:[#allocation2 + $0xd8] sm:$0xf]
    %v89 = vld [vmem:[#allocation2 + $0xdc] sm:$0xf]
    %v90 = vld [vmem:[#allocation2 + $0xe0] sm:$0xf]
    %v91 = vld [vmem:[#allocation2 + $0xe4] sm:$0xf]
    %v92 = vld [vmem:[#allocation2 + $0xe8] sm:$0xf]
    %v93 = vld [vmem:[#allocation2 + $0xec] sm:$0xf]
    %v94 = vld [vmem:[#allocation2 + $0xf0] sm:$0xf]
    %v95 = vld [vmem:[#allocation2 + $0xf4] sm:$0xf]
    %v96 = vld [vmem:[#allocation2 + $0xf8] sm:$0xf]
    %v97 = vld [vmem:[#allocation2 + $0xfc] sm:$0xf]
    %v98 = vld [vmem:[#allocation2 + $0x100] sm:$0xf]
    %v99 = vld [vmem:[#allocation2 + $0x104] sm:$0xf]
    %v100 = vld [vmem:[#allocation2 + $0x108] sm:$0xf]
    %v101 = vld [vmem:[#allocation2 + $0x10c] sm:$0xf]
    %v102 = vld [vmem:[#allocation2 + $0x110] sm:$0xf]
    %v103 = vld [vmem:[#allocation2 + $0x114] sm:$0xf]
    %v104 = vld [vmem:[#allocation2 + $0x118] sm:$0xf]
    %v105 = vld [vmem:[#allocation2 + $0x11c] sm:$0xf]
    %v106 = vld [vmem:[#allocation2 + $0x120] sm:$0xf]
    %v107 = vld [vmem:[#allocation2 + $0x124] sm:$0xf]
    %v108 = vld [vmem:[#allocation2 + $0x128] sm:$0xf]
    %v109 = vld [vmem:[#allocation2 + $0x12c] sm:$0xf]
    %v110 = vld [vmem:[#allocation2 + $0x130] sm:$0xf]
    %v111 = vld [vmem:[#allocation2 + $0x134] sm:$0xf]
    %v112 = vld [vmem:[#allocation2 + $0x138] sm:$0xf]
    %v113 = vld [vmem:[#allocation2 + $0x13c] sm:$0xf]
    %v114 = vld [vmem:[#allocation2 + $0x140] sm:$0xf]
    %v115 = vld [vmem:[#allocation2 + $0x144] sm:$0xf]
    %v116 = vld [vmem:[#allocation2 + $0x148] sm:$0xf]
    %v117 = vld [vmem:[#allocation2 + $0x14c] sm:$0xf]
    %v118 = vld [vmem:[#allocation2 + $0x150] sm:$0xf]
    %v119 = vld [vmem:[#allocation2 + $0x154] sm:$0xf]
    %v120 = vld [vmem:[#allocation2 + $0x158] sm:$0xf]
    %v121 = vld [vmem:[#allocation2 + $0x15c] sm:$0xf]
    %v122 = vld [vmem:[#allocation2 + $0x160] sm:$0xf]
    %v123 = vld [vmem:[#allocation2 + $0x164] sm:$0xf]
    %v124 = vld [vmem:[#allocation2 + $0x168] sm:$0xf]
    %v125 = vld [vmem:[#allocation2 + $0x16c] sm:$0xf]
    %v126 = vld [vmem:[#allocation2 + $0x170] sm:$0xf]
    %v127 = vld [vmem:[#allocation2 + $0x174] sm:$0xf]
    %v128 = vld [vmem:[#allocation2 + $0x178] sm:$0xf]
    %v129 = vld [vmem:[#allocation2 + $0x17c] sm:$0xf]
    %v130 = vld [vmem:[%s2] sm:$0x1]
    %v132 = vlaneseq
    %v133 = vshrl.u32 %v132, 7
    %v134 = vsub.s32 0, %v133
    %v135 = vrot.slane %v130, %v134
    %v141 = vcombine.low %v30, %v31
    %v142 = vcombine.high %v30, %v31
    %v143 = vcombine.low %v32, %v33
    %v144 = vcombine.high %v32, %v33
    %v146 = vunpack.c.l.s4 1966171168
    %v147 = vunpack.c.0.s8 %v146
    %v148 = vlaneseq
    %v149 = vshrl.u32 %v148, 7
    %v150 = vsub.s32 %v147, %v149
    %v151 = vrot.slane %v141, %v150
    %v153 = vunpack.c.l.s4 1966171168
    %v154 = vunpack.c.0.s8 %v153
    %v155 = vlaneseq
    %v156 = vshrl.u32 %v155, 7
    %v157 = vsub.s32 %v154, %v156
    %v158 = vrot.slane %v142, %v157
    %v160 = vunpack.c.l.s4 1966171168
    %v161 = vunpack.c.0.s8 %v160
    %v162 = vlaneseq
    %v163 = vshrl.u32 %v162, 7
    %v164 = vsub.s32 %v161, %v163
    %v165 = vrot.slane %v143, %v164
    %v167 = vunpack.c.l.s4 1966171168
    %v168 = vunpack.c.0.s8 %v167
    %v169 = vlaneseq
    %v170 = vshrl.u32 %v169, 7
    %v171 = vsub.s32 %v168, %v170
    %v172 = vrot.slane %v144, %v171
    %v173 = vcombine.low %v151, %v165
    %v174 = vcombine.high %v151, %v165
    %v175 = vcombine.low %v158, %v172
    %v176 = vcombine.high %v158, %v172
    %v178 = vunpack.c.l.s4 1966171168
    %v179 = vunpack.c.0.s8 %v178
    %v180 = vlaneseq
    %v181 = vshrl.u32 %v180, 7
    %v182 = vsub.s32 %v179, %v181
    %v183 = vrot.slane %v173, %v182
    %v185 = vunpack.c.l.s4 1966171168
    %v186 = vunpack.c.0.s8 %v185
    %v187 = vlaneseq
    %v188 = vshrl.u32 %v187, 7
    %v189 = vsub.s32 %v186, %v188
    %v190 = vrot.slane %v175, %v189
    %v192 = vunpack.c.l.s4 1966171168
    %v193 = vunpack.c.0.s8 %v192
    %v194 = vlaneseq
    %v195 = vshrl.u32 %v194, 7
    %v196 = vsub.s32 %v193, %v195
    %v197 = vrot.slane %v174, %v196
    %v199 = vunpack.c.l.s4 1966171168
    %v200 = vunpack.c.0.s8 %v199
    %v201 = vlaneseq
    %v202 = vshrl.u32 %v201, 7
    %v203 = vsub.s32 %v200, %v202
    %v204 = vrot.slane %v176, %v203
    %v205 = vcombine.high %v183, %v183
    %v206 = vcombine.high %v197, %v197
    %v309 = vunpack.c.l.b16 %v34
    %v310 = vunpack.c.l.b16 %v35
    %v311 = vunpack.c.l.b16 %v36
    %v312 = vunpack.c.l.b16 %v37
    %v313 = vunpack.c.l.b16 %v38
    %v314 = vunpack.c.l.b16 %v39
    %v315 = vunpack.c.l.b16 %v40
    %v316 = vunpack.c.l.b16 %v41
    %v317 = vunpack.c.l.b16 %v42
    %v318 = vunpack.c.l.b16 %v43
    %v319 = vunpack.c.l.b16 %v44
    %v320 = vunpack.c.l.b16 %v45
    %v321 = vunpack.c.l.b16 %v46
    %v322 = vunpack.c.l.b16 %v47
    %v323 = vunpack.c.l.b16 %v48
    %v324 = vunpack.c.l.b16 %v49
    %v325 = vunpack.c.l.b16 %v50
    %v326 = vunpack.c.l.b16 %v51
    %v327 = vunpack.c.l.b16 %v52
    %v328 = vunpack.c.l.b16 %v53
    %v329 = vunpack.c.l.b16 %v54
    %v330 = vunpack.c.l.b16 %v55
    %v331 = vunpack.c.l.b16 %v56
    %v332 = vunpack.c.l.b16 %v57
    %v333 = vunpack.c.l.b16 %v58
    %v334 = vunpack.c.l.b16 %v59
    %v335 = vunpack.c.l.b16 %v60
    %v336 = vunpack.c.l.b16 %v61
    %v337 = vunpack.c.l.b16 %v62
    %v338 = vunpack.c.l.b16 %v63
    %v339 = vunpack.c.l.b16 %v64
    %v340 = vunpack.c.l.b16 %v65
    %v341 = vunpack.c.l.b16 %v66
    %v342 = vunpack.c.l.b16 %v67
    %v343 = vunpack.c.l.b16 %v68
    %v344 = vunpack.c.l.b16 %v69
    %v345 = vunpack.c.l.b16 %v70
    %v346 = vunpack.c.l.b16 %v71
    %v347 = vunpack.c.l.b16 %v72
    %v348 = vunpack.c.l.b16 %v73
    %v349 = vunpack.c.l.b16 %v74
    %v350 = vunpack.c.l.b16 %v75
    %v351 = vunpack.c.l.b16 %v76
    %v352 = vunpack.c.l.b16 %v77
    %v353 = vunpack.c.l.b16 %v78
    %v354 = vunpack.c.l.b16 %v79
    %v355 = vunpack.c.l.b16 %v80
    %v356 = vunpack.c.l.b16 %v81
    %v357 = vunpack.c.l.b16 %v82
    %v358 = vunpack.c.l.b16 %v83
    %v359 = vunpack.c.l.b16 %v84
    %v360 = vunpack.c.l.b16 %v85
    %v361 = vunpack.c.l.b16 %v86
    %v362 = vunpack.c.l.b16 %v87
    %v363 = vunpack.c.l.b16 %v88
    %v364 = vunpack.c.l.b16 %v89
    %v365 = vunpack.c.l.b16 %v90
    %v366 = vunpack.c.l.b16 %v91
    %v367 = vunpack.c.l.b16 %v92
    %v368 = vunpack.c.l.b16 %v93
    %v369 = vunpack.c.l.b16 %v94
    %v370 = vunpack.c.l.b16 %v95
    %v371 = vunpack.c.l.b16 %v96
    %v372 = vunpack.c.l.b16 %v97
    %v373 = vunpack.c.l.b16 %v98
    %v374 = vunpack.c.l.b16 %v99
    %v375 = vunpack.c.l.b16 %v100
    %v376 = vunpack.c.l.b16 %v101
    %v377 = vunpack.c.l.b16 %v102
    %v378 = vunpack.c.l.b16 %v103
    %v379 = vunpack.c.l.b16 %v104
    %v380 = vunpack.c.l.b16 %v105
    %v381 = vunpack.c.l.b16 %v106
    %v382 = vunpack.c.l.b16 %v107
    %v383 = vunpack.c.l.b16 %v108
    %v384 = vunpack.c.l.b16 %v109
    %v385 = vunpack.c.l.b16 %v110
    %v386 = vunpack.c.l.b16 %v111
    %v387 = vunpack.c.l.b16 %v112
    %v388 = vunpack.c.l.b16 %v113
    %v389 = vunpack.c.l.b16 %v114
    %v390 = vunpack.c.l.b16 %v115
    %v391 = vunpack.c.l.b16 %v116
    %v392 = vunpack.c.l.b16 %v117
    %v393 = vunpack.c.l.b16 %v118
    %v394 = vunpack.c.l.b16 %v119
    %v395 = vunpack.c.l.b16 %v120
    %v396 = vunpack.c.l.b16 %v121
    %v397 = vunpack.c.l.b16 %v122
    %v398 = vunpack.c.l.b16 %v123
    %v399 = vunpack.c.l.b16 %v124
    %v400 = vunpack.c.l.b16 %v125
    %v401 = vunpack.c.l.b16 %v126
    %v402 = vunpack.c.l.b16 %v127
    %v403 = vunpack.c.l.b16 %v128
    %v404 = vunpack.c.l.b16 %v129
    %v405 = vpack.c.b16 %v310, %v309
    %v406 = vpack.c.b16 %v312, %v311
    %v407 = vpack.c.b16 %v314, %v313
    %v408 = vpack.c.b16 %v316, %v315
    %v409 = vpack.c.b16 %v318, %v317
    %v410 = vpack.c.b16 %v320, %v319
    %v411 = vpack.c.b16 %v322, %v321
    %v412 = vpack.c.b16 %v324, %v323
    %v413 = vpack.c.b16 %v326, %v325
    %v414 = vpack.c.b16 %v328, %v327
    %v415 = vpack.c.b16 %v330, %v329
    %v416 = vpack.c.b16 %v332, %v331
    %v417 = vpack.c.b16 %v334, %v333
    %v418 = vpack.c.b16 %v336, %v335
    %v419 = vpack.c.b16 %v338, %v337
    %v420 = vpack.c.b16 %v340, %v339
    %v421 = vpack.c.b16 %v342, %v341
    %v422 = vpack.c.b16 %v344, %v343
    %v423 = vpack.c.b16 %v346, %v345
    %v424 = vpack.c.b16 %v348, %v347
    %v425 = vpack.c.b16 %v350, %v349
    %v426 = vpack.c.b16 %v352, %v351
    %v427 = vpack.c.b16 %v354, %v353
    %v428 = vpack.c.b16 %v356, %v355
    %v429 = vpack.c.b16 %v358, %v357
    %v430 = vpack.c.b16 %v360, %v359
    %v431 = vpack.c.b16 %v362, %v361
    %v432 = vpack.c.b16 %v364, %v363
    %v433 = vpack.c.b16 %v366, %v365
    %v434 = vpack.c.b16 %v368, %v367
    %v435 = vpack.c.b16 %v370, %v369
    %v436 = vpack.c.b16 %v372, %v371
    %v437 = vpack.c.b16 %v374, %v373
    %v438 = vpack.c.b16 %v376, %v375
    %v439 = vpack.c.b16 %v378, %v377
    %v440 = vpack.c.b16 %v380, %v379
    %v441 = vpack.c.b16 %v382, %v381
    %v442 = vpack.c.b16 %v384, %v383
    %v443 = vpack.c.b16 %v386, %v385
    %v444 = vpack.c.b16 %v388, %v387
    %v445 = vpack.c.b16 %v390, %v389
    %v446 = vpack.c.b16 %v392, %v391
    %v447 = vpack.c.b16 %v394, %v393
    %v448 = vpack.c.b16 %v396, %v395
    %v449 = vpack.c.b16 %v398, %v397
    %v450 = vpack.c.b16 %v400, %v399
    %v451 = vpack.c.b16 %v402, %v401
    %v452 = vpack.c.b16 %v404, %v403
    %501 = vmatprep.subr.bf16.mxu0 0
    %502 = vmatpush1.bf16.msra.mxu0 %v405
    %503 = vmatprep.subr.bf16.mxu0 0
    %504 = vmatpush1.bf16.msra.mxu0 %v406
    %505 = vmatprep.subr.bf16.mxu0 0
    %506 = vmatpush1.bf16.msra.mxu0 %v407
    %507 = vmatprep.subr.bf16.mxu0 0
    %508 = vmatpush1.bf16.msra.mxu0 %v408
    %509 = vmatprep.subr.bf16.mxu0 0
    %510 = vmatpush1.bf16.msra.mxu0 %v409
    %511 = vmatprep.subr.bf16.mxu0 0
    %512 = vmatpush1.bf16.msra.mxu0 %v410
    %513 = vmatprep.subr.bf16.mxu0 0
    %514 = vmatpush1.bf16.msra.mxu0 %v411
    %515 = vmatprep.subr.bf16.mxu0 0
    %516 = vmatpush1.bf16.msra.mxu0 %v412
    %517 = vmatprep.subr.bf16.mxu0 0
    %518 = vmatpush1.bf16.msra.mxu0 %v413
    %519 = vmatprep.subr.bf16.mxu0 0
    %520 = vmatpush1.bf16.msra.mxu0 %v414
    %521 = vmatprep.subr.bf16.mxu0 0
    %522 = vmatpush1.bf16.msra.mxu0 %v415
    %523 = vmatprep.subr.bf16.mxu0 0
    %524 = vmatpush1.bf16.msra.mxu0 %v416
    %525 = vmatprep.subr.bf16.mxu0 0
    %526 = vmatpush1.bf16.msra.mxu0 %v417
    %527 = vmatprep.subr.bf16.mxu0 0
    %528 = vmatpush1.bf16.msra.mxu0 %v418
    %529 = vmatprep.subr.bf16.mxu0 0
    %530 = vmatpush1.bf16.msra.mxu0 %v419
    %531 = vmatprep.subr.bf16.mxu0 0
    %532 = vmatpush1.bf16.msra.mxu0 %v420
    %533 = vmatprep.mubr.bf16.mxu0 %v197
    %534 = vmatmul.mubr.bf16.gmra.mrb[0].mxu0 %v183
    %v535 = vpop.f32.mrb[0].mxu0
    %v536 = vadd.f32 %v135, %v535
    %v537 = vpop.f32.mrb[0].mxu0
    %v538 = vpop.f32.mrb[0].mxu0
    %v539 = vpop.f32.mrb[0].mxu0
    %540 = vdwg.mxu0
    %541 = vmatprep.subr.bf16.mxu0 0
    %542 = vmatpush1.bf16.msra.mxu0 %v421
    %543 = vmatprep.subr.bf16.mxu0 0
    %544 = vmatpush1.bf16.msra.mxu0 %v422
    %545 = vmatprep.subr.bf16.mxu0 0
    %546 = vmatpush1.bf16.msra.mxu0 %v423
    %547 = vmatprep.subr.bf16.mxu0 0
    %548 = vmatpush1.bf16.msra.mxu0 %v424
    %549 = vmatprep.subr.bf16.mxu0 0
    %550 = vmatpush1.bf16.msra.mxu0 %v425
    %551 = vmatprep.subr.bf16.mxu0 0
    %552 = vmatpush1.bf16.msra.mxu0 %v426
    %553 = vmatprep.subr.bf16.mxu0 0
    %554 = vmatpush1.bf16.msra.mxu0 %v427
    %555 = vmatprep.subr.bf16.mxu0 0
    %556 = vmatpush1.bf16.msra.mxu0 %v428
    %557 = vmatprep.subr.bf16.mxu0 0
    %558 = vmatpush1.bf16.msra.mxu0 %v429
    %559 = vmatprep.subr.bf16.mxu0 0
    %560 = vmatpush1.bf16.msra.mxu0 %v430
    %561 = vmatprep.subr.bf16.mxu0 0
    %562 = vmatpush1.bf16.msra.mxu0 %v431
    %563 = vmatprep.subr.bf16.mxu0 0
    %564 = vmatpush1.bf16.msra.mxu0 %v432
    %565 = vmatprep.subr.bf16.mxu0 0
    %566 = vmatpush1.bf16.msra.mxu0 %v433
    %567 = vmatprep.subr.bf16.mxu0 0
    %568 = vmatpush1.bf16.msra.mxu0 %v434
    %569 = vmatprep.subr.bf16.mxu0 0
    %570 = vmatpush1.bf16.msra.mxu0 %v435
    %571 = vmatprep.subr.bf16.mxu0 0
    %572 = vmatpush1.bf16.msra.mxu0 %v436
    %573 = vmatprep.mubr.bf16.mxu0 %v206
    %574 = vmatmul.mubr.bf16.gmra.mrb[0].mxu0 %v205
    %v575 = vpop.f32.mrb[0].mxu0
    %v576 = vadd.f32 %v536, %v575
    %v577 = vpop.f32.mrb[0].mxu0
    %v578 = vpop.f32.mrb[0].mxu0
    %v579 = vpop.f32.mrb[0].mxu0
    %580 = vdwg.mxu0
    %581 = vmatprep.subr.bf16.mxu0 0
    %582 = vmatpush1.bf16.msra.mxu0 %v437
    %583 = vmatprep.subr.bf16.mxu0 0
    %584 = vmatpush1.bf16.msra.mxu0 %v438
    %585 = vmatprep.subr.bf16.mxu0 0
    %586 = vmatpush1.bf16.msra.mxu0 %v439
    %587 = vmatprep.subr.bf16.mxu0 0
    %588 = vmatpush1.bf16.msra.mxu0 %v440
    %589 = vmatprep.subr.bf16.mxu0 0
    %590 = vmatpush1.bf16.msra.mxu0 %v441
    %591 = vmatprep.subr.bf16.mxu0 0
    %592 = vmatpush1.bf16.msra.mxu0 %v442
    %593 = vmatprep.subr.bf16.mxu0 0
    %594 = vmatpush1.bf16.msra.mxu0 %v443
    %595 = vmatprep.subr.bf16.mxu0 0
    %596 = vmatpush1.bf16.msra.mxu0 %v444
    %597 = vmatprep.subr.bf16.mxu0 0
    %598 = vmatpush1.bf16.msra.mxu0 %v445
    %599 = vmatprep.subr.bf16.mxu0 0
    %600 = vmatpush1.bf16.msra.mxu0 %v446
    %601 = vmatprep.subr.bf16.mxu0 0
    %602 = vmatpush1.bf16.msra.mxu0 %v447
    %603 = vmatprep.subr.bf16.mxu0 0
    %604 = vmatpush1.bf16.msra.mxu0 %v448
    %605 = vmatprep.subr.bf16.mxu0 0
    %606 = vmatpush1.bf16.msra.mxu0 %v449
    %607 = vmatprep.subr.bf16.mxu0 0
    %608 = vmatpush1.bf16.msra.mxu0 %v450
    %609 = vmatprep.subr.bf16.mxu0 0
    %610 = vmatpush1.bf16.msra.mxu0 %v451
    %611 = vmatprep.subr.bf16.mxu0 0
    %612 = vmatpush1.bf16.msra.mxu0 %v452
    %613 = vmatprep.mubr.bf16.mxu0 %v204
    %614 = vmatmul.mubr.bf16.gmra.mrb[0].mxu0 %v190
    %v615 = vpop.f32.mrb[0].mxu0
    %v616 = vadd.f32 %v576, %v615
    %v617 = vpop.f32.mrb[0].mxu0
    %v618 = vpop.f32.mrb[0].mxu0
    %v619 = vpop.f32.mrb[0].mxu0
    %620 = vdwg.mxu0
    %621 = vmax.xlane.f32.xlu0 %v616
    %v622 = vpop.xlane.xlu0 %621
    %v623 = vsub.f32 %v616, %v622
    %v624 = vmul.f32 %v623, 1.442695
    %v625 = vpow.pop %v624
    %626 = vadd.xlane.f32.xlu0 %v625
    %v627 = vpop.xlane.xlu0 %626
    %v628 = vrcp.pop %v627
    %v629 = vmul.f32 %v625, %v628
    %vm630 = vcmask 31744
    %631 = vst.msk [vmem:[#allocation5] sm:$0xff] %vm630, %v629
    // Predicated region
    $region18: #{_lambda_.1} parent=1 // pred_check
      _
    $region19: #{_lambda_.1} parent=1 // pred_check_branch
      %633 = sbr.rel (0) target = $region21
    $region20: #{_lambda_.1} parent=1 // pred_region
      %s635 = ssub.s32 128, 32
      %636 = vsyncadd [#allocation4], %s635
      %s637 = sshll.u32 [#allocation5], 4
      %s638 = int_to_ptr.vmem [resolvable:$true] %s637
      %643 = dma.vmem_to_hbm [thread:$0]  %s638, 32, %s3, [#allocation4], 32, 32, 2
    $region21: #{_lambda_.1} parent=1 // pred_fallthru
      _
    // Predicated region
    $region22: #{_lambda_.1} parent=1 // pred_check
      _
    $region23: #{_lambda_.1} parent=1 // pred_check_branch
      %645 = sbr.rel (0) target = $region25
    $region24: #{_lambda_.1} parent=1 // pred_region
      %646 = dma.done [#allocation4], 128
    $region25: #{_lambda_.1} parent=1 // pred_fallthru
      _
    %647 = vsyncpa [#allocation3], 1
    %648 = vsyncpa [#allocation4], 1

</llo_original>
